<compile_context>
chip_gen: v7x
topology: tpu7x:2x2x1
jax: 0.10.0
libtpu: 0.0.40
codegen_flags: <defaults>
</compile_context>

<pallas_src>
import functools

import jax
import jax.numpy as jnp
from jax.experimental import pallas as pl
from jax.experimental.pallas import tpu as pltpu


# --------------------------------------------------------------------------- #
# Kernel: one lane-dense MXU matmul per grid step.                            #
# --------------------------------------------------------------------------- #
def _fits_kernel(x_ref, a_ref, out_ref):
    # x_ref  : [L, T]  lane tile (T columns = independent series), bf16/f32
    # a_ref  : [N, L]  fused operator (norm + rfft-trunc + complex Linear +
    #                  zero-pad + irfft + *ratio + de-norm), resident in VMEM
    # out_ref: [N, T]
    out_ref[...] = jnp.dot(
        a_ref[...], x_ref[...], preferred_element_type=jnp.float32
    ).astype(out_ref.dtype)


# --------------------------------------------------------------------------- #
# Operator construction (hoisted out of the per-call path; depends only on    #
# static config + learned complex-Linear weights).                            #
# --------------------------------------------------------------------------- #
def build_fits_operator(w_real, w_imag, *, seq_len, pred_len, dominance_freq,
                        matmul_dtype=jnp.bfloat16):
    """Returns A' [N, L] with  xy = A' @ x  (N = seq_len + pred_len), norm folded."""
    L = seq_len
    N = seq_len + pred_len
    length_ratio = (seq_len + pred_len) / seq_len
    out_freq = int(dominance_freq * length_ratio)             # same truncation as module
    F_out = N // 2 + 1
    assert dominance_freq <= L // 2 + 1
    assert out_freq <= F_out
    assert w_real.shape == (out_freq, dominance_freq)
    assert w_imag.shape == (out_freq, dominance_freq)

    # Truncated forward DFT: rfft(x)[k] = sum_n x[n] * exp(-2i*pi*k*n/L)
    # (phase reduced mod L in integers for accuracy at large L*dom)
    ki = jnp.arange(dominance_freq, dtype=jnp.int32)
    ni = jnp.arange(L, dtype=jnp.int32)
    phase_f = ((ki[:, None] * ni[None, :]) % L).astype(jnp.float32) * (2.0 * jnp.pi / L)
    Fr = jnp.cos(phase_f)                                     # [dom, L]
    Fi = -jnp.sin(phase_f)                                    # [dom, L]

    # irfft (c2r convention; imaginary parts of DC / Nyquist bins are ignored):
    # x[n] = (1/N)[ReX0 + 2*sum_{1<=k<N/2}(ReXk cos - ImXk sin) + (-1)^n ReX_{N/2}]
    ko = jnp.arange(out_freq, dtype=jnp.int32)
    no = jnp.arange(N, dtype=jnp.int32)
    phase_i = ((no[:, None] * ko[None, :]) % N).astype(jnp.float32) * (2.0 * jnp.pi / N)
    is_edge = (ko == 0) | ((N % 2 == 0) & (ko == N // 2))
    scale = jnp.where(is_edge, 1.0, 2.0) / N
    Gr = jnp.cos(phase_i) * scale[None, :]                                  # [N, out_freq]
    Gi = -jnp.sin(phase_i) * scale[None, :] * jnp.where(is_edge, 0.0, 1.0)[None, :]

    # Fuse rfft-trunc -> complex Linear -> zero-pad -> irfft -> *ratio into one
    # real [N, L] operator (zero-pad is implicit: G only carries out_freq columns).
    Mr = w_real @ Fr - w_imag @ Fi                            # [out_freq, L]
    Mi = w_real @ Fi + w_imag @ Fr                            # [out_freq, L]
    A = (Gr @ Mr + Gi @ Mi) * length_ratio                    # [N, L]

    # Fold the per-series instance normalization exactly:
    #   out = (A @ ((x-mean)/std))*std + mean = A@x + (1 - A@1_L)*mean
    #       = (A + (1/L)*(1_N - A@1_L) 1_L^T) @ x
    row_sum = jnp.sum(A, axis=1, keepdims=True)               # [N, 1] = A @ 1_L
    A = A + (1.0 - row_sum) / L
    return A.astype(matmul_dtype)


# --------------------------------------------------------------------------- #
# Tiling / VMEM budgeting.                                                    #
# --------------------------------------------------------------------------- #
def _round_up(x, m):
    return pl.cdiv(x, m) * m


def _choose_lane_tile(num_cols, L, N, x_bytes, out_bytes, a_bytes,
                      max_lane_tile, vmem_budget_bytes):
    """Lane tile (multiple of 128) sized for the per-core VMEM budget.

    Also caps the tile so the 1-D grid has >= 2 steps whenever there is enough
    work to split: dimension_semantics=("parallel",) then shards lane tiles
    across v7x's two TensorCores (no-op on single-core v5e/v6e).
    """
    cols128 = max(128, _round_up(num_cols, 128))
    tile = min(_round_up(max_lane_tile, 128), cols128)
    if cols128 >= 256:
        tile = min(tile, max(128, (cols128 // 2) // 128 * 128))

    def vmem_bytes(t):
        # double-buffered x tile + double-buffered out tile + double-buffered A'
        return 2 * L * t * x_bytes + 2 * N * t * out_bytes + 2 * N * L * a_bytes

    while tile > 128 and vmem_bytes(tile) > vmem_budget_bytes:
        tile -= 128
    return tile


# --------------------------------------------------------------------------- #
# Forward wrappers.                                                           #
# --------------------------------------------------------------------------- #
def fits_forward_lane_dense(x_cols, A, *, lane_tile=1024,
                            out_dtype=jnp.float32,
                            vmem_budget_bytes=20 * 1024 * 1024,
                            vmem_limit_bytes=48 * 1024 * 1024):
    """x_cols: [seq_len, M] (each column an independent series, e.g. M = B*C).

    Returns [seq_len + pred_len, M] in `out_dtype`.  Preferred entry point for
    callers that can keep their data lane-dense (skips host-side transposes).
    """
    L, M = x_cols.shape
    N = A.shape[0]
    assert A.shape[1] == L

    x_bytes = jnp.dtype(A.dtype).itemsize     # x is streamed in A's dtype
    a_bytes = jnp.dtype(A.dtype).itemsize
    o_bytes = jnp.dtype(out_dtype).itemsize

    tile = _choose_lane_tile(M, L, N, x_bytes, o_bytes, a_bytes,
                             lane_tile, vmem_budget_bytes)
    M_pad = _round_up(M, tile)

    x_cols = x_cols.astype(A.dtype)           # halves HBM input traffic when bf16
    if M_pad != M:
        x_cols = jnp.pad(x_cols, ((0, 0), (0, M_pad - M)))

    out = pl.pallas_call(
        _fits_kernel,
        out_shape=jax.ShapeDtypeStruct((N, M_pad), out_dtype),
        grid_spec=pltpu.PrefetchScalarGridSpec(
            num_scalar_prefetch=0,
            grid=(M_pad // tile,),
            in_specs=[
                pl.BlockSpec((L, tile), lambda j: (0, j)),   # input lane tile
                pl.BlockSpec((N, L), lambda j: (0, 0)),      # fused operator (constant
                                                             # index -> no re-DMA per step)
            ],
            out_specs=pl.BlockSpec((N, tile), lambda j: (0, j)),
        ),
        compiler_params=pltpu.CompilerParams(
            dimension_semantics=("parallel",),
            vmem_limit_bytes=vmem_limit_bytes),
    )(x_cols, A)
    return out[:, :M]


def fits_forward(x, A, *, seq_len, pred_len, **kwargs):
    """Module-shaped wrapper: x [B, seq_len, C] -> [B, seq_len+pred_len, C].

    NOTE: the [B,L,C] <-> [L,B*C] transposes around the kernel are extra HBM
    round trips executed by XLA; callers that can hold data lane-dense should
    use fits_forward_lane_dense directly.
    """
    B, L, C = x.shape
    assert L == seq_len
    N = seq_len + pred_len
    assert A.shape == (N, L)
    x_cols = jnp.transpose(x, (1, 0, 2)).reshape(L, B * C)
    out = fits_forward_lane_dense(x_cols, A, **kwargs)
    return jnp.transpose(out.reshape(N, B, C), (1, 0, 2))


# --------------------------------------------------------------------------- #
# Pure-JAX reference mirroring the PyTorch forward (individual=False).        #
# --------------------------------------------------------------------------- #
def fits_reference(x, w_real, w_imag, *, seq_len, pred_len, dominance_freq):
    N = seq_len + pred_len
    length_ratio = (seq_len + pred_len) / seq_len
    out_freq = int(dominance_freq * length_ratio)
    F_out = N // 2 + 1

    x_mean = jnp.mean(x, axis=1, keepdims=True)
    xc = x - x_mean
    x_var = jnp.var(xc, axis=1, keepdims=True, ddof=1) + 1e-5
    xn = xc / jnp.sqrt(x_var)

    low_specx = jnp.fft.rfft(xn, axis=1)[:, :dominance_freq, :]          # [B, dom, C]
    W = (w_real + 1j * w_imag).astype(jnp.complex64)                     # [out_freq, dom]
    low_specxy_ = jnp.einsum('bkc,jk->bjc', low_specx, W)                # [B, out_freq, C]
    low_specxy = jnp.zeros((x.shape[0], F_out, x.shape[2]), dtype=low_specxy_.dtype)
    low_specxy = low_specxy.at[:, :out_freq, :].set(low_specxy_)
    low_xy = jnp.fft.irfft(low_specxy, n=N, axis=1) * length_ratio
    return (low_xy * jnp.sqrt(x_var) + x_mean).astype(jnp.float32)


if __name__ == "__main__":
    # configs: seq_len=16, pred_len=16, channels=4, dominance_freq=5, individual=False
    B, seq_len, pred_len, C, dom = 2, 16, 16, 4, 5
    out_freq = int(dom * ((seq_len + pred_len) / seq_len))   # = 10 (same truncation as module)

    key = jax.random.PRNGKey(0)
    kx, kwr, kwi = jax.random.split(key, 3)
    x = jax.random.normal(kx, (B, seq_len, C), dtype=jnp.float32)
    # Deterministic complex-Linear weights (real + imaginary parts).
    bound = 1.0 / jnp.sqrt(dom)
    w_real = jax.random.uniform(kwr, (out_freq, dom), minval=-bound, maxval=bound,
                                dtype=jnp.float32)
    w_imag = jax.random.uniform(kwi, (out_freq, dom), minval=-bound, maxval=bound,
                                dtype=jnp.float32)

    ref = fits_reference(x, w_real, w_imag,
                         seq_len=seq_len, pred_len=pred_len, dominance_freq=dom)

    fwd = jax.jit(functools.partial(fits_forward, seq_len=seq_len, pred_len=pred_len))

    # (a) f32 operator: checks that the folded-normalization algebra matches the
    #     original module semantics to tight tolerance.
    A32 = jax.block_until_ready(build_fits_operator(
        w_real, w_imag, seq_len=seq_len, pred_len=pred_len, dominance_freq=dom,
        matmul_dtype=jnp.float32))
    out32 = jax.block_until_ready(fwd(x, A32))
    assert out32.shape == (B, seq_len + pred_len, C)
    assert jnp.allclose(out32, ref, rtol=1e-3, atol=1e-3), "f32 mismatch vs reference"

    # (b) bf16 operator (performance default): MXU-native dtype, looser tolerance.
    A16 = jax.block_until_ready(build_fits_operator(
        w_real, w_imag, seq_len=seq_len, pred_len=pred_len, dominance_freq=dom,
        matmul_dtype=jnp.bfloat16))
    out16 = jax.block_until_ready(fwd(x, A16))
    assert out16.shape == (B, seq_len + pred_len, C)
    assert jnp.allclose(out16, ref, rtol=5e-2, atol=5e-2), "bf16 mismatch vs reference"

    print("KERNEL_OK")
</pallas_src>

<mosaic_0001>
module attributes {stable_mosaic.version = 11 : i64} {
  func.func @_fits_kernel(%arg0: i32, %arg1: memref<16x128xf32, #tpu.memory_space<vmem>>, %arg2: memref<32x16xf32, #tpu.memory_space<vmem>>, %arg3: memref<32x128xf32, #tpu.memory_space<vmem>>) attributes {dimension_semantics = [#tpu.dimension_semantics<parallel>], iteration_bounds = array<i64: 1>, scalar_prefetch = 0 : i64, scratch_operands = 0 : i64, tpu.core_type = #tpu.core_type<tc>, window_params = [{transform_indices = @transform_0, window_bounds = array<i64: 16, 128>}, {pipeline_mode = #tpu.pipeline_mode<synchronous>, transform_indices = @transform_1, window_bounds = array<i64: 32, 16>}, {transform_indices = @transform_2, window_bounds = array<i64: 32, 128>}]} {
    %c0 = arith.constant 0 : index
    %c0_0 = arith.constant 0 : index
    %0 = vector.load %arg2[%c0, %c0_0] : memref<32x16xf32, #tpu.memory_space<vmem>>, vector<32x16xf32>
    %c0_1 = arith.constant 0 : index
    %c0_2 = arith.constant 0 : index
    %1 = vector.load %arg1[%c0_1, %c0_2] : memref<16x128xf32, #tpu.memory_space<vmem>>, vector<16x128xf32>
    %cst = arith.constant dense<0.000000e+00> : vector<32x128xf32>
    %2 = tpu.matmul %0, %1, %cst {dimension_numbers = #tpu.dot_dimension_numbers<[1], [0], [0], [1], [0, 0, 1, 1], [], []>} : vector<32x16xf32>, vector<16x128xf32>, vector<32x128xf32> -> vector<32x128xf32>
    %c0_3 = arith.constant 0 : index
    %c0_4 = arith.constant 0 : index
    %3 = vector.load %arg3[%c0_3, %c0_4] : memref<32x128xf32, #tpu.memory_space<vmem>>, vector<32x128xf32>
    tpu.vector_store %arg3[%c0_3, %c0_4], %2 {strides = array<i32>} : memref<32x128xf32, #tpu.memory_space<vmem>>, vector<32x128xf32>,
    return
  }
  func.func @transform_0(%arg0: i32) -> (i32, i32) {
    %c0_i32 = arith.constant 0 : i32
    %c0_i32_0 = arith.constant 0 : i32
    return %c0_i32, %arg0 : i32, i32
  }
  func.func @transform_1(%arg0: i32) -> (i32, i32) {
    %c0_i32 = arith.constant 0 : i32
    %c0_i32_0 = arith.constant 0 : i32
    %c0_i32_1 = arith.constant 0 : i32
    return %c0_i32, %c0_i32_0 : i32, i32
  }
  func.func @transform_2(%arg0: i32) -> (i32, i32) {
    %c0_i32 = arith.constant 0 : i32
    %c0_i32_0 = arith.constant 0 : i32
    return %c0_i32, %arg0 : i32, i32
  }
}

</mosaic_0001>

<llo_original>
// kernel: fits_forward.1
$region0: #{fits_forward.1}
  #allocation0 [shape = 'u32[]', space=smem, size = 0x4, offset = 0x4, fixed_abs, tag = 'smem constant byte address 0x4 - core index']
  #allocation1 [shape = 'u32[144,128]{1,0:T(1,128)}', space=vmem, size = 0x12000, scoped, tag = 'internal scratch']
  %s0 = inlined_call_operand.vmem [shape: f32[16,128], index: 0, kind: input, shape index: {}]
  %s1 = inlined_call_operand.vmem [shape: f32[32,16], index: 1, kind: input, shape index: {}]
  %s2 = inlined_call_operand.vmem [shape: f32[32,128], index: 2, kind: output, shape index: {}]
  %s3 = sld [smem:[#allocation0]]
  $region18: #{fits_forward.1} parent=0
    _
  %s5 = ssub.s32 1, %s3
  %s6 = scalar_select 0, %s5, %s3
  // Predicated region
  $region2: #{fits_forward.1} parent=0 // pred_check
    _
  $region3: #{fits_forward.1} parent=0 // pred_check_branch
    %8 = sbr.rel (0) target = $region5
  $region4: #{fits_forward.1} parent=0 // pred_region
    _
  $region5: #{fits_forward.1} parent=0 // pred_fallthru
    _
  // Predicated region
  $region6: #{fits_forward.1} parent=0 // pred_check
    _
  $region7: #{fits_forward.1} parent=0 // pred_check_branch
    %10 = sbr.rel (0) target = $region9
  $region8: #{fits_forward.1} parent=0 // pred_region
    _
  $region9: #{fits_forward.1} parent=0 // pred_fallthru
    _
  %v11 = vld [vmem:[%s1] sm:$0xff]
  %v12 = vld [vmem:[%s1 + $0x8] sm:$0xff]
  %v13 = vld [vmem:[%s1 + $0x10] sm:$0xff]
  %v14 = vld [vmem:[%s1 + $0x18] sm:$0xff]
  %v15 = vld [vmem:[%s0] sm:$0xff]
  %v16 = vld [vmem:[%s0 + $0x8] sm:$0xff]
  %vm17 = vcmask 130048
  %v19 = vsel %vm17, %v11, 0
  %v22 = vsel %vm17, %v12, 0
  %v25 = vsel %vm17, %v13, 0
  %v28 = vsel %vm17, %v14, 0
  %30 = vmatprep.subr.mxu0 0.0
  %31 = vmatpush1.msra.mxu0 %v15
  %32 = vmatprep.subr.mxu0 0.0
  %33 = vmatpush1.msra.mxu0 %v16
  %34 = vmatprep.subr.mxu0 0.0
  %35 = vmatpush1.msra.mxu0 0.0
  %36 = vmatprep.subr.mxu0 0.0
  %37 = vmatpush1.msra.mxu0 0.0
  %38 = vmatprep.subr.mxu0 0.0
  %39 = vmatpush1.msra.mxu0 0.0
  %40 = vmatprep.subr.mxu0 0.0
  %41 = vmatpush1.msra.mxu0 0.0
  %42 = vmatprep.subr.mxu0 0.0
  %43 = vmatpush1.msra.mxu0 0.0
  %44 = vmatprep.subr.mxu0 0.0
  %45 = vmatpush1.msra.mxu0 0.0
  %46 = vmatprep.subr.mxu0 0.0
  %47 = vmatpush1.msra.mxu0 0.0
  %48 = vmatprep.subr.mxu0 0.0
  %49 = vmatpush1.msra.mxu0 0.0
  %50 = vmatprep.subr.mxu0 0.0
  %51 = vmatpush1.msra.mxu0 0.0
  %52 = vmatprep.subr.mxu0 0.0
  %53 = vmatpush1.msra.mxu0 0.0
  %54 = vmatprep.subr.mxu0 0.0
  %55 = vmatpush1.msra.mxu0 0.0
  %56 = vmatprep.subr.mxu0 0.0
  %57 = vmatpush1.msra.mxu0 0.0
  %58 = vmatprep.subr.mxu0 0.0
  %59 = vmatpush1.msra.mxu0 0.0
  %60 = vmatprep.subr.mxu0 0.0
  %61 = vmatpush1.msra.mxu0 0.0
  %62 = vmatprep.subr.mxu0 0.0
  %63 = vmatpush1.msra.mxu0 0.0
  %64 = vmatprep.subr.mxu0 0.0
  %65 = vmatpush1.msra.mxu0 0.0
  %66 = vmatprep.subr.mxu0 0.0
  %67 = vmatpush1.msra.mxu0 0.0
  %68 = vmatprep.subr.mxu0 0.0
  %69 = vmatpush1.msra.mxu0 0.0
  %70 = vmatprep.subr.mxu0 0.0
  %71 = vmatpush1.msra.mxu0 0.0
  %72 = vmatprep.subr.mxu0 0.0
  %73 = vmatpush1.msra.mxu0 0.0
  %74 = vmatprep.subr.mxu0 0.0
  %75 = vmatpush1.msra.mxu0 0.0
  %76 = vmatprep.subr.mxu0 0.0
  %77 = vmatpush1.msra.mxu0 0.0
  %78 = vmatprep.subr.mxu0 0.0
  %79 = vmatpush1.msra.mxu0 0.0
  %80 = vmatprep.subr.mxu0 0.0
  %81 = vmatpush1.msra.mxu0 0.0
  %82 = vmatprep.subr.mxu0 0.0
  %83 = vmatpush1.msra.mxu0 0.0
  %84 = vmatprep.subr.mxu0 0.0
  %85 = vmatpush1.msra.mxu0 0.0
  %86 = vmatprep.subr.mxu0 0.0
  %87 = vmatpush1.msra.mxu0 0.0
  %88 = vmatprep.subr.mxu0 0.0
  %89 = vmatpush1.msra.mxu0 0.0
  %90 = vmatprep.subr.mxu0 0.0
  %91 = vmatpush1.msra.mxu0 0.0
  %92 = vmatprep.subr.mxu0 0.0
  %93 = vmatpush1.msra.mxu0 0.0
  %94 = vmatprep.mubr.f32.mxu0 0.0
  %95 = vmatmul.mubr.f32.gmra.mrb[0].mxu0 %v19
  %v96 = vpop.f32.mrb[0].mxu0
  %v97 = vadd.f32 0.0, %v96
  %v98 = vpop.f32.mrb[0].mxu0
  %99 = vmatprep.mubr.f32.mxu0 0.0
  %100 = vmatmul.mubr.f32.gmra.mrb[0].mxu0 %v22
  %v101 = vpop.f32.mrb[0].mxu0
  %v102 = vadd.f32 0.0, %v101
  %v103 = vpop.f32.mrb[0].mxu0
  %104 = vmatprep.mubr.f32.mxu0 0.0
  %105 = vmatmul.mubr.f32.gmra.mrb[0].mxu0 %v25
  %v106 = vpop.f32.mrb[0].mxu0
  %v107 = vadd.f32 0.0, %v106
  %v108 = vpop.f32.mrb[0].mxu0
  %109 = vmatprep.mubr.f32.mxu0 0.0
  %110 = vmatmul.mubr.f32.gmra.mrb[0].mxu0 %v28
  %v111 = vpop.f32.mrb[0].mxu0
  %v112 = vadd.f32 0.0, %v111
  %v113 = vpop.f32.mrb[0].mxu0
  %114 = vdwg.mxu0
  %115 = vst [vmem:[%s2] sm:$0xff] %v97
  %116 = vst [vmem:[%s2 + $0x8] sm:$0xff] %v102
  %117 = vst [vmem:[%s2 + $0x10] sm:$0xff] %v107
  %118 = vst [vmem:[%s2 + $0x18] sm:$0xff] %v112
  // Predicated region
  $region10: #{fits_forward.1} parent=0 // pred_check
    _
  $region11: #{fits_forward.1} parent=0 // pred_check_branch
    %120 = sbr.rel (0) target = $region13
  $region12: #{fits_forward.1} parent=0 // pred_region
    _
  $region13: #{fits_forward.1} parent=0 // pred_fallthru
    _
  // Predicated region
  $region14: #{fits_forward.1} parent=0 // pred_check
    _
  $region15: #{fits_forward.1} parent=0 // pred_check_branch
    %122 = sbr.rel (0) target = $region17
  $region16: #{fits_forward.1} parent=0 // pred_region
    _
  $region17: #{fits_forward.1} parent=0 // pred_fallthru
    _

</llo_original>
